<compile_context>
chip_gen: v6e
topology: v6e:2x2x1
jax: 0.10.0
libtpu: 0.0.40
codegen_flags: <defaults>
</compile_context>

<pallas_src>
import functools

import jax
import jax.numpy as jnp
from jax.experimental import pallas as pl
from jax.experimental.pallas import tpu as pltpu


def _elbo_kernel(rate_ref, pred_ref, targ_ref, mse_ref, elbo_ref, acc_ref, *, n_total):
    i = pl.program_id(0)

    @pl.when(i == 0)
    def _():
        acc_ref[...] = jnp.zeros_like(acc_ref)

    p = pred_ref[...]
    t = targ_ref[...]
    if p.dtype != jnp.float32:
        p = p.astype(jnp.float32)
    if t.dtype != jnp.float32:
        t = t.astype(jnp.float32)

    d = p - t
    sq = d * d                                         # (tile_rows, 128), VPU only
    # Tree-style partial sums into a full vreg; no per-step cross-lane reduce.
    # (tr, 128) -> (tr//8, 8, 128) is an aligned regrouping (free relayout).
    acc_ref[...] += jnp.sum(sq.reshape(-1, 8, 128), axis=0)

    @pl.when(i == pl.num_programs(0) - 1)
    def _():
        # Single full reduction at the very end; keep results as (1,1) vectors.
        mse = jnp.sum(acc_ref[...], keepdims=True) / n_total          # (1, 1)
        rate_v = jnp.full((1, 1), rate_ref[0], dtype=jnp.float32)
        sp = jnp.logaddexp(rate_v, 0.0)                                # softplus(rate)
        kl = 0.5 * jnp.log1p(1.0 / (sp * sp))          # 0.5*log(1 + softplus(rate)^-2)
        mse_ref[...] = mse
        elbo_ref[...] = mse + kl


def elbo_loss(pred, target, rate, *, training=True, tile_rows=1024):
    """Pallas implementation of ELBOLoss.forward.

    tile_rows: rows of 128 lanes per grid step.  Default 1024 -> 512 KiB per
    f32 input block (2 MiB with both inputs double-buffered), which fits every
    TPU generation including v7x's reduced VMEM and is past the HBM-roofline
    tile-size plateau.  Clamped / rounded for small inputs.
    """
    lanes = 128
    n_total = int(pred.size)

    # Effective tile: clamp to the data size, keep a multiple of 8 sublanes.
    rows = -(-n_total // lanes)                      # ceil-div
    tr = min(int(tile_rows), int(rows))
    tr = max(8, ((tr + 7) // 8) * 8)
    padded_rows = -(-rows // tr) * tr
    pad_elems = padded_rows * lanes - n_total

    flat_p = pred.reshape(-1)
    flat_t = target.reshape(-1)
    if pad_elems:
        # Zero-pad both operands -> diff is 0 on the pad, SSE unaffected.
        flat_p = jnp.pad(flat_p, (0, pad_elems))
        flat_t = jnp.pad(flat_t, (0, pad_elems))

    # Native dtype: the kernel casts to f32 per-tile; no HBM f32 copy here.
    p2 = flat_p.reshape(padded_rows, lanes)
    t2 = flat_t.reshape(padded_rows, lanes)
    rate1 = jnp.reshape(rate, (1,)).astype(jnp.float32)

    kernel = functools.partial(_elbo_kernel, n_total=float(n_total))
    grid = (padded_rows // tr,)

    mse, elbo = pl.pallas_call(
        kernel,
        out_shape=(
            jax.ShapeDtypeStruct((1, 1), jnp.float32),
            jax.ShapeDtypeStruct((1, 1), jnp.float32),
        ),
        grid_spec=pltpu.PrefetchScalarGridSpec(
            num_scalar_prefetch=0,
            grid=grid,
            in_specs=[
                pl.BlockSpec(memory_space=pltpu.MemorySpace.SMEM),   # rate (scalar param)
                pl.BlockSpec((tr, lanes), lambda i: (i, 0)),         # pred tile
                pl.BlockSpec((tr, lanes), lambda i: (i, 0)),         # target tile
            ],
            out_specs=[
                pl.BlockSpec((1, 1), lambda i: (0, 0)),  # mse (eval-mode output)
                pl.BlockSpec((1, 1), lambda i: (0, 0)),  # mse + kl (training output)
            ],
            scratch_shapes=[pltpu.VMEM((8, 128), jnp.float32)],      # full-vreg SSE accumulator
        ),
        compiler_params=pltpu.CompilerParams(
            dimension_semantics=("arbitrary",),          # reduction axis, accumulator resident
            vmem_limit_bytes=32 * 1024 * 1024,           # safe on v5e/v6e/v7x
        ),
    )(rate1, p2, t2)

    # TODO(synk): on v7x, a leading "parallel" grid axis could split the
    # reduction across the 2 TensorCores (per-core partials reduced in the
    # wrapper) for up to ~2x effective DMA bandwidth on very large inputs.
    return elbo[0, 0] if training else mse[0, 0]


if __name__ == "__main__":
    key = jax.random.PRNGKey(0)
    k_pred, k_targ = jax.random.split(key)

    # Small NCHW prediction/target pair.
    pred = jax.random.normal(k_pred, (2, 4, 16, 16), dtype=jnp.float32)
    target = jax.random.normal(k_targ, (2, 4, 16, 16), dtype=jnp.float32)

    # Deterministic init of the model's `rate` parameter (scalar, shape (1,)).
    rate = jnp.array([0.5], dtype=jnp.float32)

    out_train = jax.block_until_ready(elbo_loss(pred, target, rate, training=True))
    out_eval = jax.block_until_ready(elbo_loss(pred, target, rate, training=False))

    # Pure-JAX reference check.
    mse_ref = jnp.mean((pred - target) ** 2)
    sp_ref = jax.nn.softplus(rate[0])
    kl_ref = 0.5 * jnp.log(1.0 + sp_ref ** -2)
    assert jnp.allclose(out_train, mse_ref + kl_ref, rtol=1e-5, atol=1e-5)
    assert jnp.allclose(out_eval, mse_ref, rtol=1e-5, atol=1e-5)

    # Also exercise an odd (non-divisible) size and a bf16 input path.
    pred_b = jax.random.normal(k_pred, (3, 5, 17, 13), dtype=jnp.bfloat16)
    targ_b = jax.random.normal(k_targ, (3, 5, 17, 13), dtype=jnp.bfloat16)
    out_b = jax.block_until_ready(elbo_loss(pred_b, targ_b, rate, training=True))
    mse_b = jnp.mean((pred_b.astype(jnp.float32) - targ_b.astype(jnp.float32)) ** 2)
    assert jnp.allclose(out_b, mse_b + kl_ref, rtol=1e-4, atol=1e-4)

    print("KERNEL_OK")
</pallas_src>

<mosaic_0001>
module attributes {stable_mosaic.version = 11 : i64} {
  func.func @_elbo_kernel(%arg0: i32, %arg1: memref<1xf32, #tpu.memory_space<smem>>, %arg2: memref<16x128xf32, #tpu.memory_space<vmem>>, %arg3: memref<16x128xf32, #tpu.memory_space<vmem>>, %arg4: memref<1x1xf32, #tpu.memory_space<vmem>>, %arg5: memref<1x1xf32, #tpu.memory_space<vmem>>, %arg6: memref<8x128xf32, #tpu.memory_space<vmem>>) attributes {dimension_semantics = [#tpu.dimension_semantics<arbitrary>], iteration_bounds = array<i64: 1>, scalar_prefetch = 0 : i64, scratch_operands = 1 : i64, tpu.core_type = #tpu.core_type<tc>, window_params = [{transform_indices = @transform_0, window_bounds = array<i64: 1>}, {transform_indices = @transform_1, window_bounds = array<i64: 16, 128>}, {transform_indices = @transform_2, window_bounds = array<i64: 16, 128>}, {pipeline_mode = #tpu.pipeline_mode<synchronous>, transform_indices = @transform_3, window_bounds = array<i64: 1, 1>}, {pipeline_mode = #tpu.pipeline_mode<synchronous>, transform_indices = @transform_4, window_bounds = array<i64: 1, 1>}]} {
    %c0_i32 = arith.constant 0 : i32
    %0 = arith.cmpi eq, %arg0, %c0_i32 : i32
    %1 = arith.extui %0 : i1 to i32
    %c0_i32_0 = arith.constant 0 : i32
    %2 = arith.cmpi ne, %1, %c0_i32_0 : i32
    scf.if %2 {
      %cst_10 = arith.constant 0.000000e+00 : f32
      %15 = vector.broadcast %cst_10 : f32 to vector<8x128xf32>
      %c0_11 = arith.constant 0 : index
      %c0_12 = arith.constant 0 : index
      %16 = vector.load %arg6[%c0_11, %c0_12] : memref<8x128xf32, #tpu.memory_space<vmem>>, vector<8x128xf32>
      tpu.vector_store %arg6[%c0_11, %c0_12], %15 {strides = array<i32>} : memref<8x128xf32, #tpu.memory_space<vmem>>, vector<8x128xf32>,
    } else {
    }
    %c0 = arith.constant 0 : index
    %c0_1 = arith.constant 0 : index
    %3 = vector.load %arg2[%c0, %c0_1] : memref<16x128xf32, #tpu.memory_space<vmem>>, vector<16x128xf32>
    %c0_2 = arith.constant 0 : index
    %c0_3 = arith.constant 0 : index
    %4 = vector.load %arg3[%c0_2, %c0_3] : memref<16x128xf32, #tpu.memory_space<vmem>>, vector<16x128xf32>
    %5 = arith.subf %3, %4 : vector<16x128xf32>
    %6 = arith.mulf %5, %5 : vector<16x128xf32>
    %c0_4 = arith.constant 0 : index
    %c0_5 = arith.constant 0 : index
    %7 = vector.load %arg6[%c0_4, %c0_5] : memref<8x128xf32, #tpu.memory_space<vmem>>, vector<8x128xf32>
    %8 = vector.shape_cast %6 : vector<16x128xf32> to vector<2x8x128xf32>
    %cst = arith.constant dense<0.000000e+00> : vector<8x128xf32>
    %9 = vector.multi_reduction <add>, %8, %cst [0] : vector<2x8x128xf32> to vector<8x128xf32>
    %10 = arith.addf %7, %9 : vector<8x128xf32>
    %c0_6 = arith.constant 0 : index
    %c0_7 = arith.constant 0 : index
    %11 = vector.load %arg6[%c0_6, %c0_7] : memref<8x128xf32, #tpu.memory_space<vmem>>, vector<8x128xf32>
    tpu.vector_store %arg6[%c0_6, %c0_7], %10 {strides = array<i32>} : memref<8x128xf32, #tpu.memory_space<vmem>>, vector<8x128xf32>,
    %c0_i32_8 = arith.constant 0 : i32
    %12 = arith.cmpi eq, %arg0, %c0_i32_8 : i32
    %13 = arith.extui %12 : i1 to i32
    %c0_i32_9 = arith.constant 0 : i32
    %14 = arith.cmpi ne, %13, %c0_i32_9 : i32
    scf.if %14 {
      %c0_10 = arith.constant 0 : index
      %c0_11 = arith.constant 0 : index
      %15 = vector.load %arg6[%c0_10, %c0_11] : memref<8x128xf32, #tpu.memory_space<vmem>>, vector<8x128xf32>
      %16 = vector.shape_cast %15 : vector<8x128xf32> to vector<1x8x128xf32>
      %cst_12 = arith.constant dense<0.000000e+00> : vector<1xf32>
      %17 = vector.multi_reduction <add>, %16, %cst_12 [1, 2] : vector<1x8x128xf32> to vector<1xf32>
      %18 = vector.shape_cast %17 : vector<1xf32> to vector<1x1x1xf32>
      %19 = vector.extract %18[0, 0, 0] : f32 from vector<1x1x1xf32>
      %20 = vector.broadcast %19 : f32 to vector<1x1xf32>
      %cst_13 = arith.constant 2.048000e+03 : f32
      %21 = vector.broadcast %cst_13 : f32 to vector<1x1xf32>
      %22 = arith.divf %20, %21 : vector<1x1xf32>
      %c0_14 = arith.constant 0 : index
      %23 = memref.load %arg1[%c0_14] : memref<1xf32, #tpu.memory_space<smem>>
      %24 = vector.broadcast %23 : f32 to vector<1x1xf32>
      %cst_15 = arith.constant 0.000000e+00 : f32
      %25 = vector.broadcast %cst_15 : f32 to vector<1x1xf32>
      %26 = arith.maximumf %24, %25 : vector<1x1xf32>
      %27 = vector.broadcast %cst_15 : f32 to vector<1x1xf32>
      %28 = arith.subf %24, %27 : vector<1x1xf32>
      %29 = arith.cmpf one, %28, %28 : vector<1x1xf32>
      %30 = vector.broadcast %cst_15 : f32 to vector<1x1xf32>
      %31 = arith.addf %24, %30 : vector<1x1xf32>
      %32 = math.absf %28 : vector<1x1xf32>
      %cst_16 = arith.constant 0.000000e+00 : f32
      %33 = vector.broadcast %cst_16 : f32 to vector<1x1xf32>
      %34 = arith.subf %33, %32 : vector<1x1xf32>
      %35 = math.exp %34 : vector<1x1xf32>
      %36 = math.log1p %35 : vector<1x1xf32>
      %37 = arith.addf %26, %36 : vector<1x1xf32>
      %38 = arith.select %29, %31, %37 : vector<1x1xi1>, vector<1x1xf32>
      %39 = arith.mulf %38, %38 : vector<1x1xf32>
      %cst_17 = arith.constant 1.000000e+00 : f32
      %40 = vector.broadcast %cst_17 : f32 to vector<1x1xf32>
      %41 = arith.divf %40, %39 : vector<1x1xf32>
      %42 = math.log1p %41 : vector<1x1xf32>
      %cst_18 = arith.constant 5.000000e-01 : f32
      %43 = vector.broadcast %cst_18 : f32 to vector<1x1xf32>
      %44 = arith.mulf %43, %42 : vector<1x1xf32>
      %c0_19 = arith.constant 0 : index
      %c0_20 = arith.constant 0 : index
      %45 = vector.load %arg4[%c0_19, %c0_20] : memref<1x1xf32, #tpu.memory_space<vmem>>, vector<1x1xf32>
      tpu.vector_store %arg4[%c0_19, %c0_20], %22 {strides = array<i32>} : memref<1x1xf32, #tpu.memory_space<vmem>>, vector<1x1xf32>,
      %46 = arith.addf %22, %44 : vector<1x1xf32>
      %c0_21 = arith.constant 0 : index
      %c0_22 = arith.constant 0 : index
      %47 = vector.load %arg5[%c0_21, %c0_22] : memref<1x1xf32, #tpu.memory_space<vmem>>, vector<1x1xf32>
      tpu.vector_store %arg5[%c0_21, %c0_22], %46 {strides = array<i32>} : memref<1x1xf32, #tpu.memory_space<vmem>>, vector<1x1xf32>,
    } else {
    }
    return
  }
  func.func @transform_0(%arg0: i32) -> i32 {
    %c0_i32 = arith.constant 0 : i32
    %c0_i32_0 = arith.constant 0 : i32
    return %c0_i32 : i32
  }
  func.func @transform_1(%arg0: i32) -> (i32, i32) {
    %c0_i32 = arith.constant 0 : i32
    %c0_i32_0 = arith.constant 0 : i32
    return %arg0, %c0_i32 : i32, i32
  }
  func.func @transform_2(%arg0: i32) -> (i32, i32) {
    %c0_i32 = arith.constant 0 : i32
    %c0_i32_0 = arith.constant 0 : i32
    return %arg0, %c0_i32 : i32, i32
  }
  func.func @transform_3(%arg0: i32) -> (i32, i32) {
    %c0_i32 = arith.constant 0 : i32
    %c0_i32_0 = arith.constant 0 : i32
    %c0_i32_1 = arith.constant 0 : i32
    return %c0_i32, %c0_i32_0 : i32, i32
  }
  func.func @transform_4(%arg0: i32) -> (i32, i32) {
    %c0_i32 = arith.constant 0 : i32
    %c0_i32_0 = arith.constant 0 : i32
    %c0_i32_1 = arith.constant 0 : i32
    return %c0_i32, %c0_i32_0 : i32, i32
  }
}

</mosaic_0001>

<llo_original>
// kernel: tpu_custom_call.1
$region0: #{tpu_custom_call.1}
  #allocation0 [shape = 'u32[]', space=smem, size = 0x4, offset = 0x4, fixed_abs, tag = 'smem constant byte address 0x4 - core index']
  #allocation1 [shape = 'u32[144,128]{1,0:T(1,128)}', space=vmem, size = 0x12000, scoped, tag = 'internal scratch']
  #allocation2 [shape = 'f32[8,128]{1,0:T(8,128)}', space=vmem, size = 0x1000, scoped, tag = 'scratch operand']
  #allocation3 [shape = 'f32[1]{0:T(128)S(6)}', space=smem, size = 0x200, scoped, tag = 'scoped memory for tpu_custom_call.1']
  %s0 = inlined_call_operand.<no memory space> [shape: f32[1], index: 0, kind: input, shape index: {}]
  %s1 = inlined_call_operand.hbm [shape: f32[16,128], index: 1, kind: input, shape index: {}]
  %s2 = inlined_call_operand.hbm [shape: f32[16,128], index: 2, kind: input, shape index: {}]
  %s3 = inlined_call_operand.hbm [shape: f32[1,1], index: 3, kind: output, shape index: {0}]
  %s4 = inlined_call_operand.hbm [shape: f32[1,1], index: 4, kind: output, shape index: {1}]
  %5 = xla_tuple %s3, %s4
  %s6 = sld [smem:[#allocation0]]
  $region46: #{tpu_custom_call.1} parent=0
    _
  %s8 = ssub.s32 1, %s6
  %s9 = scalar_select 0, %s8, %s6
  %10 = sst [smem:[#allocation3]] %s0
  $region1: #{tpu_custom_call.1} parent=0
    #allocation4 [shape = 'u8[8192]{0}', space=vmem, size = 0x2000, scoped, tag = 'input window, operand 1, single buffered']
    #allocation5 [shape = 's32[1]{0}', space=sflag, size = 0x4, scoped, tag = 'scoped memory for tpu_custom_call.1']
    #allocation6 [shape = 's32[1]{0}', space=sflag, size = 0x4, scoped, tag = 'scoped memory for tpu_custom_call.1']
    #allocation7 [shape = 'u8[8192]{0}', space=vmem, size = 0x2000, scoped, tag = 'input window, operand 2, single buffered']
    #allocation8 [shape = 's32[1]{0}', space=sflag, size = 0x4, scoped, tag = 'scoped memory for tpu_custom_call.1']
    #allocation9 [shape = 'u8[512]{0}', space=vmem, size = 0x400, scoped, tag = 'output window, operand 0, single buffered']
    #allocation10 [shape = 'u8[512]{0}', space=vmem, size = 0x400, scoped, tag = 'output window, operand 1, single buffered']
    #allocation11 [shape = 's32[1]{0}', space=sflag, size = 0x4, scoped, tag = 'scoped memory for tpu_custom_call.1']
    %11 = vsyncpa [#allocation5], 0
    %12 = vsyncpa [#allocation8], 0
    %13 = vsyncpa [#allocation6], 0
    %14 = vsyncpa [#allocation11], 0
    // Predicated region
    $region2: #{tpu_custom_call.1} parent=1 // pred_check
      _
    $region3: #{tpu_custom_call.1} parent=1 // pred_check_branch
      %16 = sbr.rel (0) target = $region5
    $region4: #{tpu_custom_call.1} parent=1 // pred_region
      _
    $region5: #{tpu_custom_call.1} parent=1 // pred_fallthru
      _
    // Predicated region
    $region6: #{tpu_custom_call.1} parent=1 // pred_check
      _
    $region7: #{tpu_custom_call.1} parent=1 // pred_check_branch
      %18 = sbr.rel (0) target = $region9
    $region8: #{tpu_custom_call.1} parent=1 // pred_region
      %s20 = ssub.s32 256, 256
      %21 = vsyncadd [#allocation5], %s20
      %s22 = sshll.u32 [#allocation4], 4
      %s23 = int_to_ptr.vmem [resolvable:$true] %s22
      %28 = dma.hbm_to_vmem [thread:$0]  %s1, 256, %s23, [#allocation5], 128, 128, 8
    $region9: #{tpu_custom_call.1} parent=1 // pred_fallthru
      _
    // Predicated region
    $region10: #{tpu_custom_call.1} parent=1 // pred_check
      _
    $region11: #{tpu_custom_call.1} parent=1 // pred_check_branch
      %30 = sbr.rel (0) target = $region13
    $region12: #{tpu_custom_call.1} parent=1 // pred_region
      %s32 = ssub.s32 256, 256
      %33 = vsyncadd [#allocation8], %s32
      %s34 = sshll.u32 [#allocation7], 4
      %s35 = int_to_ptr.vmem [resolvable:$true] %s34
      %40 = dma.hbm_to_vmem [thread:$0]  %s2, 256, %s35, [#allocation8], 128, 128, 8
    $region13: #{tpu_custom_call.1} parent=1 // pred_fallthru
      _
    // Predicated region
    $region14: #{tpu_custom_call.1} parent=1 // pred_check
      _
    $region15: #{tpu_custom_call.1} parent=1 // pred_check_branch
      %42 = sbr.rel (0) target = $region17
    $region16: #{tpu_custom_call.1} parent=1 // pred_region
      %43 = dma.done [#allocation5], 256
    $region17: #{tpu_custom_call.1} parent=1 // pred_fallthru
      _
    // Predicated region
    $region18: #{tpu_custom_call.1} parent=1 // pred_check
      _
    $region19: #{tpu_custom_call.1} parent=1 // pred_check_branch
      %45 = sbr.rel (0) target = $region21
    $region20: #{tpu_custom_call.1} parent=1 // pred_region
      %46 = dma.done [#allocation8], 256
    $region21: #{tpu_custom_call.1} parent=1 // pred_fallthru
      _
    %p47 = scmp.eq.s32.totalorder 0, 0
    // Predicated region
    $region22: #{tpu_custom_call.1} parent=1 // pred_check
      %p48 = pneg %p47
    $region23: #{tpu_custom_call.1} parent=1 // pred_check_branch
      %50 = sbr.rel (%p48) target = $region25
    $region24: #{tpu_custom_call.1} parent=1 // pred_region
      %51 = vst [vmem:[#allocation2] sm:$0xff] 0.0
    $region25: #{tpu_custom_call.1} parent=1 // pred_fallthru
      _
    %v52 = vld [vmem:[#allocation4] sm:$0xff]
    %v53 = vld [vmem:[#allocation4 + $0x8] sm:$0xff]
    %v54 = vld [vmem:[#allocation7] sm:$0xff]
    %v55 = vld [vmem:[#allocation7 + $0x8] sm:$0xff]
    %v56 = vsub.f32 %v52, %v54
    %v57 = vsub.f32 %v53, %v55
    %v58 = vmul.f32 %v56, %v56
    %v59 = vmul.f32 %v57, %v57
    %v60 = vld [vmem:[#allocation2] sm:$0xff]
    %v61 = vadd.f32 %v58, %v59
    %v62 = vadd.f32 %v60, %v61
    %63 = vst [vmem:[#allocation2] sm:$0xff] %v62
    // Predicated region
    $region26: #{tpu_custom_call.1} parent=1 // pred_check
      %p64 = pneg %p47
    $region27: #{tpu_custom_call.1} parent=1 // pred_check_branch
      %66 = sbr.rel (%p64) target = $region29
    $region28: #{tpu_custom_call.1} parent=1 // pred_region
      %v67 = vld [vmem:[#allocation2] sm:$0xff]
      %68 = vadd.xlane.f32.xlu0 %v67
      %v69 = vpop.xlane.xlu0 %68
      %v70 = vrot.slane %v69, 4
      %v71 = vadd.f32 %v69, %v70
      %v72 = vrot.slane %v71, 2
      %v73 = vadd.f32 %v71, %v72
      %v74 = vrot.slane %v73, 1
      %v75 = vadd.f32 %v73, %v74
      %s76 = vtos %v75
      %v77 = vstv %s76
      %v78 = vrcp.pop 2048.0
      %v79 = vmul.f32 %v77, %v78
      %s80 = sld [smem:[#allocation3]]
      %v81 = vstv %s80
      %v82 = vmax.f32 %v81, 0.0
      %vm83 = vcmp.ne.f32.partialorder %v81, %v81
      %v84 = vadd.f32 %v81, 0.0
      %v85 = vand.u32 2147483647, %v81
      %v86 = vsub.f32 0.0, %v85
      %v87 = vmul.f32 %v86, 1.442695
      %v88 = vpow.pop %v87
      %v89 = vadd.f32 %v88, 1.0
      %v90 = vlog2.pop %v89
      %v91 = vmul.f32 %v90, 0.6931472
      %v92 = vmul.f32 -0.5, %v88
      %v93 = vadd.f32 %v92, 1.0
      %v94 = vmul.f32 %v93, %v88
      %v95 = vand.u32 2147483647, %v88
      %vm96 = vcmp.lt.f32.partialorder %v95, 0.0004427343
      %v97 = vsel %vm96, %v94, %v91
      %v98 = vadd.f32 %v82, %v97
      %v99 = vsel %vm83, %v84, %v98
      %v100 = vmul.f32 %v99, %v99
      %v101 = vrcp.pop %v100
      %v102 = vmul.f32 1.0, %v101
      %v103 = vadd.f32 %v102, 1.0
      %v104 = vlog2.pop %v103
      %v105 = vmul.f32 %v104, 0.6931472
      %v106 = vmul.f32 -0.5, %v102
      %v107 = vadd.f32 %v106, 1.0
      %v108 = vmul.f32 %v107, %v102
      %v109 = vand.u32 2147483647, %v102
      %vm110 = vcmp.lt.f32.partialorder %v109, 0.0004427343
      %v111 = vsel %vm110, %v108, %v105
      %v112 = vmul.f32 %v111, 0.5
      %vm113 = vcmask 0
      %114 = vst.msk [vmem:[#allocation9] sm:$0x1] %vm113, %v79
      %v115 = vadd.f32 %v79, %v112
      %116 = vst.msk [vmem:[#allocation10] sm:$0x1] %vm113, %v115
    $region29: #{tpu_custom_call.1} parent=1 // pred_fallthru
      _
    // Predicated region
    $region30: #{tpu_custom_call.1} parent=1 // pred_check
      _
    $region31: #{tpu_custom_call.1} parent=1 // pred_check_branch
      %118 = sbr.rel (0) target = $region33
    $region32: #{tpu_custom_call.1} parent=1 // pred_region
      %s120 = ssub.s32 16, 16
      %121 = vsyncadd [#allocation6], %s120
      %s123 = sshll.u32 [#allocation9], 4
      %s124 = int_to_ptr.vmem [resolvable:$true] %s123
      %126 = dma.vmem_to_hbm [thread:$0]  %s124, 16, %s3, [#allocation6]
    $region33: #{tpu_custom_call.1} parent=1 // pred_fallthru
      _
    // Predicated region
    $region34: #{tpu_custom_call.1} parent=1 // pred_check
      _
    $region35: #{tpu_custom_call.1} parent=1 // pred_check_branch
      %128 = sbr.rel (0) target = $region37
    $region36: #{tpu_custom_call.1} parent=1 // pred_region
      %s130 = ssub.s32 16, 16
      %131 = vsyncadd [#allocation11], %s130
      %s133 = sshll.u32 [#allocation10], 4
      %s134 = int_to_ptr.vmem [resolvable:$true] %s133
      %136 = dma.vmem_to_hbm [thread:$0]  %s134, 16, %s4, [#allocation11]
    $region37: #{tpu_custom_call.1} parent=1 // pred_fallthru
      _
    // Predicated region
    $region38: #{tpu_custom_call.1} parent=1 // pred_check
      _
    $region39: #{tpu_custom_call.1} parent=1 // pred_check_branch
      %138 = sbr.rel (0) target = $region41
    $region40: #{tpu_custom_call.1} parent=1 // pred_region
      %139 = dma.done [#allocation6], 16
    $region41: #{tpu_custom_call.1} parent=1 // pred_fallthru
      _
    // Predicated region
    $region42: #{tpu_custom_call.1} parent=1 // pred_check
      _
    $region43: #{tpu_custom_call.1} parent=1 // pred_check_branch
      %141 = sbr.rel (0) target = $region45
    $region44: #{tpu_custom_call.1} parent=1 // pred_region
      %142 = dma.done [#allocation11], 16
    $region45: #{tpu_custom_call.1} parent=1 // pred_fallthru
      _
    %143 = vsyncpa [#allocation5], 1
    %144 = vsyncpa [#allocation8], 1
    %145 = vsyncpa [#allocation6], 1
    %146 = vsyncpa [#allocation11], 1

</llo_original>
